<compile_context>
chip_gen: v6e
topology: v6e:2x2x1
jax: 0.10.0
libtpu: 0.0.40
codegen_flags: <defaults>
</compile_context>

<pallas_src>
import jax
import jax.numpy as jnp
from jax.experimental import pallas as pl
from jax.experimental.pallas import tpu as pltpu


def _round_up(x: int, m: int) -> int:
    return ((x + m - 1) // m) * m


def bert_fc_head_kernel(cls_ref, wp_ref, bp_ref, w1_ref, b1_ref, w2_ref, out_ref):
    """Fused head for one batch tile:
       pooled = tanh(cls @ Wp + bp); h = pooled @ W1 + b1; out = h @ W2(padded)."""
    cls = cls_ref[...]  # bf16 [tb, bert_size]

    # BERT pooler: bf16 x bf16 MXU matmul, f32 accumulate, f32 epilogue (tanh + bias).
    pooled_f32 = (
        jnp.dot(cls, wp_ref[...], preferred_element_type=jnp.float32) + bp_ref[...]
    )
    pooled = jnp.tanh(pooled_f32).astype(jnp.bfloat16)

    # sentence_transform: Linear(bert_size -> cnn_size); Dropout is identity in eval.
    hidden = (
        jnp.dot(pooled, w1_ref[...], preferred_element_type=jnp.float32) + b1_ref[...]
    ).astype(jnp.bfloat16)

    # final Linear(cnn_size -> num_categories_padded, bias=False); lane-dense store.
    out_ref[...] = jnp.dot(
        hidden, w2_ref[...], preferred_element_type=jnp.float32
    ).astype(out_ref.dtype)


def bert_fc_head(cls_hidden, wp, bp, w1, b1, w2, *, num_categories, block_b=128):
    """cls_hidden: [B, bert_size] (any float dtype). Weights wp/w1/w2 are
    [in, out] (bf16); biases bp/b1 are [1, out] (f32). Returns f32 [B, num_categories]."""
    B, bert_size = cls_hidden.shape
    cnn_size = w1.shape[1]

    # Lane-dense output width (multiple of 128) — pad w2 columns, slice result later.
    n_pad = _round_up(max(num_categories, 128), 128)
    w2p = jnp.pad(w2, ((0, 0), (0, n_pad - w2.shape[1]))).astype(jnp.bfloat16)

    # Batch tile: multiple of 8 (sublane pack), grid over padded batch.
    tb = min(block_b, _round_up(B, 8))
    Bp = _round_up(B, tb)
    cls_p = jnp.pad(cls_hidden.astype(jnp.bfloat16), ((0, Bp - B), (0, 0)))

    # VMEM budget: double-buffered tiles for every operand (weights revisit the
    # same block, activations stream), generous 2x headroom, clamped for v7x.
    w_bytes = (wp.size + w1.size + w2p.size) * 2 + (bp.size + b1.size) * 4
    act_bytes = tb * bert_size * 2 + tb * n_pad * 4
    vmem_limit = int(min(96 * 2**20, max(4 * 2**20, 4 * (w_bytes + act_bytes))))

    out_padded = pl.pallas_call(
        bert_fc_head_kernel,
        out_shape=jax.ShapeDtypeStruct((Bp, n_pad), jnp.float32),
        grid_spec=pltpu.PrefetchScalarGridSpec(
            num_scalar_prefetch=0,
            grid=(Bp // tb,),
            in_specs=[
                pl.BlockSpec((tb, bert_size), lambda i: (i, 0)),       # cls tile (pipelined)
                pl.BlockSpec((bert_size, bert_size), lambda i: (0, 0)),  # Wp resident
                pl.BlockSpec((1, bert_size), lambda i: (0, 0)),          # bp resident
                pl.BlockSpec((bert_size, cnn_size), lambda i: (0, 0)),   # W1 resident
                pl.BlockSpec((1, cnn_size), lambda i: (0, 0)),           # b1 resident
                pl.BlockSpec((cnn_size, n_pad), lambda i: (0, 0)),       # W2 (padded) resident
            ],
            out_specs=pl.BlockSpec((tb, n_pad), lambda i: (i, 0)),
        ),
        compiler_params=pltpu.CompilerParams(
            dimension_semantics=("parallel",),   # megacore shard on v7x; harmless on v5e/v6e
            vmem_limit_bytes=vmem_limit,
        ),
    )(cls_p, wp, bp, w1, b1, w2p)

    return out_padded[:B, :num_categories]


class BertFcNetworkPallas:
    """JAX/Pallas port of BertFcNetwork (eval mode)."""

    def __init__(self, key, vocab_size, bert_size, cnn_size, num_categories):
        ks = jax.random.split(key, 7)
        s = 0.02
        self.num_categories = num_categories
        # Minimal deterministic BERT stand-in: token + segment embeddings + pooler.
        # TODO(synk): full multi-layer BERT encoder is out of scope; only the
        # embedding lookup + pooler + FC head semantics are reproduced.
        self.tok_emb = s * jax.random.normal(ks[0], (vocab_size, bert_size), jnp.float32)
        self.seg_emb = s * jax.random.normal(ks[1], (2, bert_size), jnp.float32)
        # BERT pooler params (bf16 weights for the MXU, f32 bias for the epilogue).
        self.wp = (s * jax.random.normal(ks[2], (bert_size, bert_size), jnp.float32)).astype(jnp.bfloat16)
        self.bp = jnp.zeros((1, bert_size), jnp.float32)
        # sentence_transform: Linear(bert_size, cnn_size)
        self.w1 = (s * jax.random.normal(ks[3], (bert_size, cnn_size), jnp.float32)).astype(jnp.bfloat16)
        self.b1 = 0.01 * jax.random.normal(ks[4], (1, cnn_size), jnp.float32)
        # linear: Linear(cnn_size, num_categories, bias=False)
        self.w2 = (s * jax.random.normal(ks[5], (cnn_size, num_categories), jnp.float32)).astype(jnp.bfloat16)

    def __call__(self, bert_token, bert_segment):
        # Glue (plain JAX): embed only the [CLS] position — no [B, S, H] materialization.
        cls_hidden = self.tok_emb[bert_token[:, 0]] + self.seg_emb[bert_segment[:, 0]]  # [B, H]
        # Hot path (Pallas kernel): pooler + sentence_transform + final linear.
        return bert_fc_head(
            cls_hidden, self.wp, self.bp, self.w1, self.b1, self.w2,
            num_categories=self.num_categories,
        )


def _reference(model, bert_token, bert_segment):
    """Pure-JAX reference using the same bf16-rounded inputs as the kernel."""
    cls = (model.tok_emb[bert_token[:, 0]] + model.seg_emb[bert_segment[:, 0]]).astype(jnp.bfloat16)
    cls = cls.astype(jnp.float32)
    pooled = jnp.tanh(cls @ model.wp.astype(jnp.float32) + model.bp)
    pooled = pooled.astype(jnp.bfloat16).astype(jnp.float32)
    hidden = pooled @ model.w1.astype(jnp.float32) + model.b1
    hidden = hidden.astype(jnp.bfloat16).astype(jnp.float32)
    return hidden @ model.w2.astype(jnp.float32)


if __name__ == "__main__":
    key = jax.random.PRNGKey(0)
    k_tok, k_seg, k_par = jax.random.split(key, 3)

    B, S = 2, 8
    vocab_size, bert_size, cnn_size, num_categories = 64, 32, 32, 8

    bert_token = jax.random.randint(k_tok, (B, S), 0, vocab_size, dtype=jnp.int32)
    bert_segment = jax.random.randint(k_seg, (B, S), 0, 2, dtype=jnp.int32)

    model = BertFcNetworkPallas(k_par, vocab_size, bert_size, cnn_size, num_categories)

    out = model(bert_token, bert_segment)
    out = jax.block_until_ready(out)

    ref = _reference(model, bert_token, bert_segment)
    assert out.shape == (B, num_categories)
    # bf16 MXU inputs + f32 accumulation: tolerance loosened vs. pure-f32.
    assert jnp.allclose(out, ref, atol=1e-3, rtol=5e-2), (out, ref)

    print("KERNEL_OK")
</pallas_src>

<mosaic_0001>
module attributes {stable_mosaic.version = 11 : i64} {
  func.func @bert_fc_head_kernel(%arg0: i32, %arg1: memref<8x32xbf16, #tpu.memory_space<vmem>>, %arg2: memref<32x32xbf16, #tpu.memory_space<vmem>>, %arg3: memref<1x32xf32, #tpu.memory_space<vmem>>, %arg4: memref<32x32xbf16, #tpu.memory_space<vmem>>, %arg5: memref<1x32xf32, #tpu.memory_space<vmem>>, %arg6: memref<32x128xbf16, #tpu.memory_space<vmem>>, %arg7: memref<8x128xf32, #tpu.memory_space<vmem>>) attributes {dimension_semantics = [#tpu.dimension_semantics<parallel>], iteration_bounds = array<i64: 1>, scalar_prefetch = 0 : i64, scratch_operands = 0 : i64, tpu.core_type = #tpu.core_type<tc>, window_params = [{transform_indices = @transform_0, window_bounds = array<i64: 8, 32>}, {pipeline_mode = #tpu.pipeline_mode<synchronous>, transform_indices = @transform_1, window_bounds = array<i64: 32, 32>}, {pipeline_mode = #tpu.pipeline_mode<synchronous>, transform_indices = @transform_2, window_bounds = array<i64: 1, 32>}, {pipeline_mode = #tpu.pipeline_mode<synchronous>, transform_indices = @transform_3, window_bounds = array<i64: 32, 32>}, {pipeline_mode = #tpu.pipeline_mode<synchronous>, transform_indices = @transform_4, window_bounds = array<i64: 1, 32>}, {pipeline_mode = #tpu.pipeline_mode<synchronous>, transform_indices = @transform_5, window_bounds = array<i64: 32, 128>}, {transform_indices = @transform_6, window_bounds = array<i64: 8, 128>}]} {
    %c0 = arith.constant 0 : index
    %c0_0 = arith.constant 0 : index
    %0 = vector.load %arg1[%c0, %c0_0] : memref<8x32xbf16, #tpu.memory_space<vmem>>, vector<8x32xbf16>
    %c0_1 = arith.constant 0 : index
    %c0_2 = arith.constant 0 : index
    %1 = vector.load %arg2[%c0_1, %c0_2] : memref<32x32xbf16, #tpu.memory_space<vmem>>, vector<32x32xbf16>
    %cst = arith.constant dense<0.000000e+00> : vector<8x32xf32>
    %2 = tpu.matmul %0, %1, %cst {dimension_numbers = #tpu.dot_dimension_numbers<[1], [0], [0], [1], [0, 0, 1, 1], [], []>} : vector<8x32xbf16>, vector<32x32xbf16>, vector<8x32xf32> -> vector<8x32xf32>
    %c0_3 = arith.constant 0 : index
    %c0_4 = arith.constant 0 : index
    %3 = vector.load %arg3[%c0_3, %c0_4] : memref<1x32xf32, #tpu.memory_space<vmem>>, vector<1x32xf32>
    %4 = vector.broadcast %3 : vector<1x32xf32> to vector<8x32xf32>
    %5 = arith.addf %2, %4 : vector<8x32xf32>
    %6 = math.tanh %5 : vector<8x32xf32>
    %7 = arith.truncf %6 : vector<8x32xf32> to vector<8x32xbf16>
    %c0_5 = arith.constant 0 : index
    %c0_6 = arith.constant 0 : index
    %8 = vector.load %arg4[%c0_5, %c0_6] : memref<32x32xbf16, #tpu.memory_space<vmem>>, vector<32x32xbf16>
    %cst_7 = arith.constant dense<0.000000e+00> : vector<8x32xf32>
    %9 = tpu.matmul %7, %8, %cst_7 {dimension_numbers = #tpu.dot_dimension_numbers<[1], [0], [0], [1], [0, 0, 1, 1], [], []>} : vector<8x32xbf16>, vector<32x32xbf16>, vector<8x32xf32> -> vector<8x32xf32>
    %c0_8 = arith.constant 0 : index
    %c0_9 = arith.constant 0 : index
    %10 = vector.load %arg5[%c0_8, %c0_9] : memref<1x32xf32, #tpu.memory_space<vmem>>, vector<1x32xf32>
    %11 = vector.broadcast %10 : vector<1x32xf32> to vector<8x32xf32>
    %12 = arith.addf %9, %11 : vector<8x32xf32>
    %13 = arith.truncf %12 : vector<8x32xf32> to vector<8x32xbf16>
    %c0_10 = arith.constant 0 : index
    %c0_11 = arith.constant 0 : index
    %14 = vector.load %arg6[%c0_10, %c0_11] : memref<32x128xbf16, #tpu.memory_space<vmem>>, vector<32x128xbf16>
    %cst_12 = arith.constant dense<0.000000e+00> : vector<8x128xf32>
    %15 = tpu.matmul %13, %14, %cst_12 {dimension_numbers = #tpu.dot_dimension_numbers<[1], [0], [0], [1], [0, 0, 1, 1], [], []>} : vector<8x32xbf16>, vector<32x128xbf16>, vector<8x128xf32> -> vector<8x128xf32>
    %c0_13 = arith.constant 0 : index
    %c0_14 = arith.constant 0 : index
    %16 = vector.load %arg7[%c0_13, %c0_14] : memref<8x128xf32, #tpu.memory_space<vmem>>, vector<8x128xf32>
    tpu.vector_store %arg7[%c0_13, %c0_14], %15 {strides = array<i32>} : memref<8x128xf32, #tpu.memory_space<vmem>>, vector<8x128xf32>,
    return
  }
  func.func @transform_0(%arg0: i32) -> (i32, i32) {
    %c0_i32 = arith.constant 0 : i32
    %c0_i32_0 = arith.constant 0 : i32
    return %arg0, %c0_i32 : i32, i32
  }
  func.func @transform_1(%arg0: i32) -> (i32, i32) {
    %c0_i32 = arith.constant 0 : i32
    %c0_i32_0 = arith.constant 0 : i32
    %c0_i32_1 = arith.constant 0 : i32
    return %c0_i32, %c0_i32_0 : i32, i32
  }
  func.func @transform_2(%arg0: i32) -> (i32, i32) {
    %c0_i32 = arith.constant 0 : i32
    %c0_i32_0 = arith.constant 0 : i32
    %c0_i32_1 = arith.constant 0 : i32
    return %c0_i32, %c0_i32_0 : i32, i32
  }
  func.func @transform_3(%arg0: i32) -> (i32, i32) {
    %c0_i32 = arith.constant 0 : i32
    %c0_i32_0 = arith.constant 0 : i32
    %c0_i32_1 = arith.constant 0 : i32
    return %c0_i32, %c0_i32_0 : i32, i32
  }
  func.func @transform_4(%arg0: i32) -> (i32, i32) {
    %c0_i32 = arith.constant 0 : i32
    %c0_i32_0 = arith.constant 0 : i32
    %c0_i32_1 = arith.constant 0 : i32
    return %c0_i32, %c0_i32_0 : i32, i32
  }
  func.func @transform_5(%arg0: i32) -> (i32, i32) {
    %c0_i32 = arith.constant 0 : i32
    %c0_i32_0 = arith.constant 0 : i32
    %c0_i32_1 = arith.constant 0 : i32
    return %c0_i32, %c0_i32_0 : i32, i32
  }
  func.func @transform_6(%arg0: i32) -> (i32, i32) {
    %c0_i32 = arith.constant 0 : i32
    %c0_i32_0 = arith.constant 0 : i32
    return %arg0, %c0_i32 : i32, i32
  }
}

</mosaic_0001>

<llo_original>
// kernel: tpu_custom_call.1
$region0: #{tpu_custom_call.1}
  #allocation0 [shape = 'u32[]', space=smem, size = 0x4, offset = 0x4, fixed_abs, tag = 'smem constant byte address 0x4 - core index']
  #allocation1 [shape = 'u32[144,128]{1,0:T(1,128)}', space=vmem, size = 0x12000, scoped, tag = 'internal scratch']
  %s0 = inlined_call_operand.hbm [shape: bf16[8,32], index: 0, kind: input, shape index: {}]
  %s1 = inlined_call_operand.hbm [shape: bf16[32,32], index: 1, kind: input, shape index: {}]
  %s2 = inlined_call_operand.vmem [shape: f32[1,32], index: 2, kind: input, shape index: {}]
  %s3 = inlined_call_operand.hbm [shape: bf16[32,32], index: 3, kind: input, shape index: {}]
  %s4 = inlined_call_operand.vmem [shape: f32[1,32], index: 4, kind: input, shape index: {}]
  %s5 = inlined_call_operand.hbm [shape: bf16[32,128], index: 5, kind: input, shape index: {}]
  %s6 = inlined_call_operand.hbm [shape: f32[8,128], index: 6, kind: output, shape index: {}]
  %s7 = sld [smem:[#allocation0]]
  $region50: #{tpu_custom_call.1} parent=0
    _
  %s9 = ssub.s32 1, %s7
  %s10 = scalar_select 0, %s9, %s7
  $region1: #{tpu_custom_call.1} parent=0
    #allocation2 [shape = 'u8[2048]{0}', space=vmem, size = 0x800, scoped, tag = 'input window, operand 0, single buffered']
    #allocation3 [shape = 's32[1]{0}', space=sflag, size = 0x4, scoped, tag = 'scoped memory for tpu_custom_call.1']
    #allocation4 [shape = 's32[1]{0}', space=sflag, size = 0x4, scoped, tag = 'scoped memory for tpu_custom_call.1']
    #allocation5 [shape = 'u8[8192]{0}', space=vmem, size = 0x2000, scoped, tag = 'input window, operand 1, single buffered']
    #allocation6 [shape = 's32[1]{0}', space=sflag, size = 0x4, scoped, tag = 'scoped memory for tpu_custom_call.1']
    #allocation7 [shape = 'u8[8192]{0}', space=vmem, size = 0x2000, scoped, tag = 'input window, operand 3, single buffered']
    #allocation8 [shape = 'u8[8192]{0}', space=vmem, size = 0x2000, scoped, tag = 'input window, operand 5, single buffered']
    #allocation9 [shape = 's32[1]{0}', space=sflag, size = 0x4, scoped, tag = 'scoped memory for tpu_custom_call.1']
    #allocation10 [shape = 'u8[4096]{0}', space=vmem, size = 0x1000, scoped, tag = 'output window, operand 0, single buffered']
    %11 = vsyncpa [#allocation3], 0
    %12 = vsyncpa [#allocation6], 0
    %13 = vsyncpa [#allocation9], 0
    %14 = vsyncpa [#allocation4], 0
    // Predicated region
    $region2: #{tpu_custom_call.1} parent=1 // pred_check
      _
    $region3: #{tpu_custom_call.1} parent=1 // pred_check_branch
      %16 = sbr.rel (0) target = $region5
    $region4: #{tpu_custom_call.1} parent=1 // pred_region
      %s18 = ssub.s32 64, 64
      %19 = vsyncadd [#allocation3], %s18
      %s21 = sshll.u32 [#allocation2], 4
      %s22 = int_to_ptr.vmem [resolvable:$true] %s21
      %24 = dma.hbm_to_vmem [thread:$0]  %s0, 64, %s22, [#allocation3]
    $region5: #{tpu_custom_call.1} parent=1 // pred_fallthru
      _
    // Predicated region
    $region6: #{tpu_custom_call.1} parent=1 // pred_check
      _
    $region7: #{tpu_custom_call.1} parent=1 // pred_check_branch
      %26 = sbr.rel (0) target = $region9
    $region8: #{tpu_custom_call.1} parent=1 // pred_region
      %s28 = ssub.s32 256, 256
      %29 = vsyncadd [#allocation6], %s28
      %s30 = sshll.u32 [#allocation5], 4
      %s31 = int_to_ptr.vmem [resolvable:$true] %s30
      %36 = dma.hbm_to_vmem [thread:$0]  %s1, 256, %s31, [#allocation6], 64, 64, 4
    $region9: #{tpu_custom_call.1} parent=1 // pred_fallthru
      _
    // Predicated region
    $region10: #{tpu_custom_call.1} parent=1 // pred_check
      _
    $region11: #{tpu_custom_call.1} parent=1 // pred_check_branch
      %38 = sbr.rel (0) target = $region13
    $region12: #{tpu_custom_call.1} parent=1 // pred_region
      _
    $region13: #{tpu_custom_call.1} parent=1 // pred_fallthru
      _
    // Predicated region
    $region14: #{tpu_custom_call.1} parent=1 // pred_check
      _
    $region15: #{tpu_custom_call.1} parent=1 // pred_check_branch
      %40 = sbr.rel (0) target = $region17
    $region16: #{tpu_custom_call.1} parent=1 // pred_region
      %s42 = ssub.s32 256, 256
      %43 = vsyncadd [#allocation6], %s42
      %s44 = sshll.u32 [#allocation7], 4
      %s45 = int_to_ptr.vmem [resolvable:$true] %s44
      %50 = dma.hbm_to_vmem [thread:$0]  %s3, 256, %s45, [#allocation6], 64, 64, 4
    $region17: #{tpu_custom_call.1} parent=1 // pred_fallthru
      _
    // Predicated region
    $region18: #{tpu_custom_call.1} parent=1 // pred_check
      _
    $region19: #{tpu_custom_call.1} parent=1 // pred_check_branch
      %52 = sbr.rel (0) target = $region21
    $region20: #{tpu_custom_call.1} parent=1 // pred_region
      _
    $region21: #{tpu_custom_call.1} parent=1 // pred_fallthru
      _
    // Predicated region
    $region22: #{tpu_custom_call.1} parent=1 // pred_check
      _
    $region23: #{tpu_custom_call.1} parent=1 // pred_check_branch
      %54 = sbr.rel (0) target = $region25
    $region24: #{tpu_custom_call.1} parent=1 // pred_region
      %s56 = ssub.s32 256, 256
      %57 = vsyncadd [#allocation9], %s56
      %s58 = sshll.u32 [#allocation8], 4
      %s59 = int_to_ptr.vmem [resolvable:$true] %s58
      %64 = dma.hbm_to_vmem [thread:$0]  %s5, 256, %s59, [#allocation9], 64, 64, 4
    $region25: #{tpu_custom_call.1} parent=1 // pred_fallthru
      _
    // Predicated region
    $region26: #{tpu_custom_call.1} parent=1 // pred_check
      _
    $region27: #{tpu_custom_call.1} parent=1 // pred_check_branch
      %66 = sbr.rel (0) target = $region29
    $region28: #{tpu_custom_call.1} parent=1 // pred_region
      %67 = dma.done [#allocation3], 64
    $region29: #{tpu_custom_call.1} parent=1 // pred_fallthru
      _
    // Predicated region
    $region30: #{tpu_custom_call.1} parent=1 // pred_check
      _
    $region31: #{tpu_custom_call.1} parent=1 // pred_check_branch
      %69 = sbr.rel (0) target = $region33
    $region32: #{tpu_custom_call.1} parent=1 // pred_region
      %70 = dma.done [#allocation6], 256
    $region33: #{tpu_custom_call.1} parent=1 // pred_fallthru
      _
    // Predicated region
    $region34: #{tpu_custom_call.1} parent=1 // pred_check
      _
    $region35: #{tpu_custom_call.1} parent=1 // pred_check_branch
      %72 = sbr.rel (0) target = $region37
    $region36: #{tpu_custom_call.1} parent=1 // pred_region
      %73 = dma.done [#allocation6], 256
    $region37: #{tpu_custom_call.1} parent=1 // pred_fallthru
      _
    // Predicated region
    $region38: #{tpu_custom_call.1} parent=1 // pred_check
      _
    $region39: #{tpu_custom_call.1} parent=1 // pred_check_branch
      %75 = sbr.rel (0) target = $region41
    $region40: #{tpu_custom_call.1} parent=1 // pred_region
      %76 = dma.done [#allocation9], 256
    $region41: #{tpu_custom_call.1} parent=1 // pred_fallthru
      _
    %v78 = vld [vmem:[#allocation2] sm:$0xf]
    %v79 = vld [vmem:[#allocation5] sm:$0xf]
    %v80 = vld [vmem:[#allocation5 + $0x4] sm:$0xf]
    %v81 = vld [vmem:[#allocation5 + $0x8] sm:$0xf]
    %v82 = vld [vmem:[#allocation5 + $0xc] sm:$0xf]
    %v83 = vld [vmem:[%s2] sm:$0x1]
    %v85 = vlaneseq
    %v86 = vshrl.u32 %v85, 7
    %v87 = vsub.s32 0, %v86
    %v88 = vrot.slane %v83, %v87
    %v94 = vunpack.c.l.b16 %v79
    %v95 = vunpack.c.l.b16 %v80
    %v96 = vunpack.c.l.b16 %v81
    %v97 = vunpack.c.l.b16 %v82
    %v98 = vpack.c.b16 %v95, %v94
    %v99 = vpack.c.b16 %v97, %v96
    %vm102 = vcmask 261120
    %v104 = vsel %vm102, %v78, 0
    %106 = vmatprep.subr.bf16.mxu0 0
    %107 = vmatpush1.bf16.msra.mxu0 0
    %108 = vmatprep.subr.bf16.mxu0 0
    %109 = vmatpush1.bf16.msra.mxu0 0
    %110 = vmatprep.subr.bf16.mxu0 0
    %111 = vmatpush1.bf16.msra.mxu0 0
    %112 = vmatprep.subr.bf16.mxu0 0
    %113 = vmatpush1.bf16.msra.mxu0 0
    %114 = vmatprep.subr.bf16.mxu0 0
    %115 = vmatpush1.bf16.msra.mxu0 0
    %116 = vmatprep.subr.bf16.mxu0 0
    %117 = vmatpush1.bf16.msra.mxu0 0
    %118 = vmatprep.subr.bf16.mxu0 0
    %119 = vmatpush1.bf16.msra.mxu0 %v99
    %120 = vmatprep.subr.bf16.mxu0 0
    %121 = vmatpush1.bf16.msra.mxu0 %v98
    %122 = vmatprep.subr.bf16.mxu0 0
    %123 = vmatpush2.bf16.msra.mxu0 0
    %124 = vmatprep.subr.bf16.mxu0 0
    %125 = vmatpush2.bf16.msra.mxu0 0
    %126 = vmatprep.subr.bf16.mxu0 0
    %127 = vmatpush2.bf16.msra.mxu0 0
    %128 = vmatprep.subr.bf16.mxu0 0
    %129 = vmatpush2.bf16.msra.mxu0 0
    %130 = vmatprep.subr.bf16.mxu0 0
    %131 = vmatpush2.bf16.msra.mxu0 0
    %132 = vmatprep.subr.bf16.mxu0 0
    %133 = vmatpush2.bf16.msra.mxu0 0
    %134 = vmatprep.subr.bf16.mxu0 0
    %135 = vmatpush2.bf16.msra.mxu0 0
    %136 = vmatprep.subr.bf16.mxu0 0
    %137 = vmatpush2.bf16.msra.mxu0 0
    %138 = vmatprep.mubr.bf16.mxu0 0
    %139 = vmatmul.mubr.bf16.gmra.mxu0 %v104
    %v140 = vpop.f32.mrf.mxu0
    %v141 = vadd.f32 %v88, %v140
    %v142 = vpop.f32.mrf.mxu0
    %v143 = vpop.f32.mrf.mxu0
    %v144 = vpop.f32.mrf.mxu0
    %145 = vdwg.mxu0
    %v146 = vtanh.pop %v141
    %v147 = vpack.c.bf16 %v146, %v146
    %v148 = vld [vmem:[#allocation7] sm:$0xf]
    %v149 = vld [vmem:[#allocation7 + $0x4] sm:$0xf]
    %v150 = vld [vmem:[#allocation7 + $0x8] sm:$0xf]
    %v151 = vld [vmem:[#allocation7 + $0xc] sm:$0xf]
    %v152 = vld [vmem:[%s4] sm:$0x1]
    %v154 = vlaneseq
    %v155 = vshrl.u32 %v154, 7
    %v156 = vsub.s32 0, %v155
    %v157 = vrot.slane %v152, %v156
    %v163 = vunpack.c.l.b16 %v148
    %v164 = vunpack.c.l.b16 %v149
    %v165 = vunpack.c.l.b16 %v150
    %v166 = vunpack.c.l.b16 %v151
    %v167 = vpack.c.b16 %v164, %v163
    %v168 = vpack.c.b16 %v166, %v165
    %v172 = vsel %vm102, %v147, 0
    %174 = vmatprep.subr.bf16.mxu0 0
    %175 = vmatpush1.bf16.msra.mxu0 0
    %176 = vmatprep.subr.bf16.mxu0 0
    %177 = vmatpush1.bf16.msra.mxu0 0
    %178 = vmatprep.subr.bf16.mxu0 0
    %179 = vmatpush1.bf16.msra.mxu0 0
    %180 = vmatprep.subr.bf16.mxu0 0
    %181 = vmatpush1.bf16.msra.mxu0 0
    %182 = vmatprep.subr.bf16.mxu0 0
    %183 = vmatpush1.bf16.msra.mxu0 0
    %184 = vmatprep.subr.bf16.mxu0 0
    %185 = vmatpush1.bf16.msra.mxu0 0
    %186 = vmatprep.subr.bf16.mxu0 0
    %187 = vmatpush1.bf16.msra.mxu0 %v168
    %188 = vmatprep.subr.bf16.mxu0 0
    %189 = vmatpush1.bf16.msra.mxu0 %v167
    %190 = vmatprep.subr.bf16.mxu0 0
    %191 = vmatpush2.bf16.msra.mxu0 0
    %192 = vmatprep.subr.bf16.mxu0 0
    %193 = vmatpush2.bf16.msra.mxu0 0
    %194 = vmatprep.subr.bf16.mxu0 0
    %195 = vmatpush2.bf16.msra.mxu0 0
    %196 = vmatprep.subr.bf16.mxu0 0
    %197 = vmatpush2.bf16.msra.mxu0 0
    %198 = vmatprep.subr.bf16.mxu0 0
    %199 = vmatpush2.bf16.msra.mxu0 0
    %200 = vmatprep.subr.bf16.mxu0 0
    %201 = vmatpush2.bf16.msra.mxu0 0
    %202 = vmatprep.subr.bf16.mxu0 0
    %203 = vmatpush2.bf16.msra.mxu0 0
    %204 = vmatprep.subr.bf16.mxu0 0
    %205 = vmatpush2.bf16.msra.mxu0 0
    %206 = vmatprep.mubr.bf16.mxu0 0
    %207 = vmatmul.mubr.bf16.gmra.mxu0 %v172
    %v208 = vpop.f32.mrf.mxu0
    %v209 = vadd.f32 %v157, %v208
    %v210 = vpop.f32.mrf.mxu0
    %v211 = vpop.f32.mrf.mxu0
    %v212 = vpop.f32.mrf.mxu0
    %213 = vdwg.mxu0
    %v214 = vpack.c.bf16 %v209, %v209
    %v215 = vld [vmem:[#allocation8] sm:$0xf]
    %v216 = vld [vmem:[#allocation8 + $0x4] sm:$0xf]
    %v217 = vld [vmem:[#allocation8 + $0x8] sm:$0xf]
    %v218 = vld [vmem:[#allocation8 + $0xc] sm:$0xf]
    %v223 = vunpack.c.l.b16 %v215
    %v224 = vunpack.c.l.b16 %v216
    %v225 = vunpack.c.l.b16 %v217
    %v226 = vunpack.c.l.b16 %v218
    %v227 = vpack.c.b16 %v224, %v223
    %v228 = vpack.c.b16 %v226, %v225
    %v232 = vsel %vm102, %v214, 0
    %234 = vmatprep.subr.bf16.mxu0 0
    %235 = vmatpush1.bf16.msra.mxu0 0
    %236 = vmatprep.subr.bf16.mxu0 0
    %237 = vmatpush1.bf16.msra.mxu0 0
    %238 = vmatprep.subr.bf16.mxu0 0
    %239 = vmatpush1.bf16.msra.mxu0 0
    %240 = vmatprep.subr.bf16.mxu0 0
    %241 = vmatpush1.bf16.msra.mxu0 0
    %242 = vmatprep.subr.bf16.mxu0 0
    %243 = vmatpush1.bf16.msra.mxu0 0
    %244 = vmatprep.subr.bf16.mxu0 0
    %245 = vmatpush1.bf16.msra.mxu0 0
    %246 = vmatprep.subr.bf16.mxu0 0
    %247 = vmatpush1.bf16.msra.mxu0 %v228
    %248 = vmatprep.subr.bf16.mxu0 0
    %249 = vmatpush1.bf16.msra.mxu0 %v227
    %250 = vmatprep.subr.bf16.mxu0 0
    %251 = vmatpush2.bf16.msra.mxu0 0
    %252 = vmatprep.subr.bf16.mxu0 0
    %253 = vmatpush2.bf16.msra.mxu0 0
    %254 = vmatprep.subr.bf16.mxu0 0
    %255 = vmatpush2.bf16.msra.mxu0 0
    %256 = vmatprep.subr.bf16.mxu0 0
    %257 = vmatpush2.bf16.msra.mxu0 0
    %258 = vmatprep.subr.bf16.mxu0 0
    %259 = vmatpush2.bf16.msra.mxu0 0
    %260 = vmatprep.subr.bf16.mxu0 0
    %261 = vmatpush2.bf16.msra.mxu0 0
    %262 = vmatprep.subr.bf16.mxu0 0
    %263 = vmatpush2.bf16.msra.mxu0 0
    %264 = vmatprep.subr.bf16.mxu0 0
    %265 = vmatpush2.bf16.msra.mxu0 0
    %266 = vmatprep.mubr.bf16.mxu0 0
    %267 = vmatmul.mubr.bf16.gmra.mxu0 %v232
    %v268 = vpop.f32.mrf.mxu0
    %v269 = vadd.f32 0.0, %v268
    %v270 = vpop.f32.mrf.mxu0
    %v271 = vpop.f32.mrf.mxu0
    %v272 = vpop.f32.mrf.mxu0
    %273 = vdwg.mxu0
    %274 = vst [vmem:[#allocation10] sm:$0xff] %v269
    // Predicated region
    $region42: #{tpu_custom_call.1} parent=1 // pred_check
      _
    $region43: #{tpu_custom_call.1} parent=1 // pred_check_branch
      %276 = sbr.rel (0) target = $region45
    $region44: #{tpu_custom_call.1} parent=1 // pred_region
      %s278 = ssub.s32 128, 128
      %279 = vsyncadd [#allocation4], %s278
      %s281 = sshll.u32 [#allocation10], 4
      %s282 = int_to_ptr.vmem [resolvable:$true] %s281
      %284 = dma.vmem_to_hbm [thread:$0]  %s282, 128, %s6, [#allocation4]
    $region45: #{tpu_custom_call.1} parent=1 // pred_fallthru
      _
    // Predicated region
    $region46: #{tpu_custom_call.1} parent=1 // pred_check
      _
    $region47: #{tpu_custom_call.1} parent=1 // pred_check_branch
      %286 = sbr.rel (0) target = $region49
    $region48: #{tpu_custom_call.1} parent=1 // pred_region
      %287 = dma.done [#allocation4], 128
    $region49: #{tpu_custom_call.1} parent=1 // pred_fallthru
      _
    %288 = vsyncpa [#allocation3], 1
    %289 = vsyncpa [#allocation6], 1
    %290 = vsyncpa [#allocation9], 1
    %291 = vsyncpa [#allocation4], 1

</llo_original>
